<compile_context>
chip_gen: v6e
topology: v6e:2x2x1
jax: 0.10.0
libtpu: 0.0.40
codegen_flags: <defaults>
</compile_context>

<pallas_src>
from functools import partial

import numpy as np

import jax
import jax.numpy as jnp
from jax.experimental import pallas as pl
from jax.experimental.pallas import tpu as pltpu


def _round_up(x, m):
    return (x + m - 1) // m * m


def _char_cnn_fused_kernel(x_col_ref, w_ref, b_ref, mask_ref, out_ref):
    """One (batch-tile, time-tile) grid step.

    x_col_ref: (TB, TL, k_max*Cin)  bf16  im2col slab
    w_ref:     (k_max*Cin, Cp)      bf16  packed conv weights (all windows)
    b_ref:     (1, Cp)              f32   packed bias
    mask_ref:  (TL, Cp)             f32   1.0 where the time position is valid
    out_ref:   (TB, Cp)             f32   running max accumulator (revisited
                                           across the time-grid axis)
    """
    t = pl.program_id(1)

    @pl.when(t == 0)
    def _init():
        # ReLU output is >= 0, so 0 is the identity for the running max.
        out_ref[...] = jnp.zeros_like(out_ref)

    tb, tl, kc = x_col_ref.shape
    cp = out_ref.shape[-1]

    # Single wide-contraction MXU matmul covering every window size and tap.
    y = jax.lax.dot_general(
        x_col_ref[...].reshape(tb * tl, kc), w_ref[...],
        (((1,), (0,)), ((), ())),
        preferred_element_type=jnp.float32)                 # (TB*TL, Cp) f32
    y = jnp.maximum(y + b_ref[...], 0.0)                    # bias + ReLU
    y = y.reshape(tb, tl, cp) * mask_ref[...][None]         # zero invalid rows
    out_ref[...] = jnp.maximum(out_ref[...], jnp.max(y, axis=1))


def char_cnn_forward(x, params, *, compute_dtype=jnp.bfloat16):
    """x: (B, L, char_embedding_dim) f32; params: list of (k, w(k,Cin,F), b(1,F)).

    Returns (B, filter_num * n_windows) f32, matching
    torch.cat([max_pool(relu(conv_k(x.permute(0,2,1)))) for k], dim=1) in eval mode.
    """
    B, L, Cin = x.shape
    ks = [int(k) for (k, _, _) in params]
    k_max = max(ks)
    if L < k_max:
        raise ValueError(f"sequence length {L} must be >= max window size {k_max}")

    F = params[0][1].shape[-1]
    n_w = len(params)
    Ctot = n_w * F
    Cp = _round_up(Ctot, 128)          # lane-dense output width (unmasked stores)
    KC = k_max * Cin                   # matmul contraction width

    # ---- pack weights / bias (layout plumbing; for a real model do this once) ----
    w_all = jnp.concatenate(
        [jnp.pad(w, ((0, k_max - k), (0, 0), (0, 0))) for (k, w, _) in params],
        axis=-1)                                            # (k_max, Cin, Ctot)
    w_all = jnp.pad(w_all, ((0, 0), (0, 0), (0, Cp - Ctot)))
    w_packed = w_all.reshape(KC, Cp).astype(compute_dtype)  # (KC, Cp)
    bias = jnp.concatenate([b for (_, _, b) in params], axis=-1)
    bias = jnp.pad(bias, ((0, 0), (0, Cp - Ctot))).astype(jnp.float32)  # (1, Cp)

    # ---- batch / time tiling (blocks are tiny vs. 64 MiB VMEM on v7x) ----
    if B <= 8:
        TB, Bp = B, B
    else:
        TB, Bp = 8, _round_up(B, 8)
    L8 = _round_up(L, 8)
    TL = L8 if L8 <= 256 else 256
    Lp = _round_up(L8, TL)

    # ---- im2col: x_col[b, t, j*Cin:(j+1)*Cin] = x[b, t+j, :]  (0 past the end) ----
    xc = x.astype(compute_dtype)
    xc = jnp.pad(xc, ((0, Bp - B), (0, Lp + k_max - 1 - L), (0, 0)))
    x_col = jnp.concatenate([xc[:, j:j + Lp, :] for j in range(k_max)], axis=-1)

    # ---- per-(time, column) validity mask: position t valid iff t <= L - k ----
    mask_np = np.zeros((Lp, Cp), np.float32)
    for i, k in enumerate(ks):
        mask_np[: L - k + 1, i * F:(i + 1) * F] = 1.0
    mask = jnp.asarray(mask_np)

    flops = int(sum(2 * B * (L - k + 1) * k * Cin * F for k in ks))
    bytes_accessed = int(
        Bp * Lp * KC * jnp.dtype(compute_dtype).itemsize      # x_col
        + KC * Cp * jnp.dtype(compute_dtype).itemsize          # weights
        + Cp * 4 + Lp * Cp * 4                                  # bias + mask
        + Bp * Cp * 4)                                          # output

    out = pl.pallas_call(
        _char_cnn_fused_kernel,
        out_shape=jax.ShapeDtypeStruct((Bp, Cp), jnp.float32),
        grid_spec=pltpu.PrefetchScalarGridSpec(
            num_scalar_prefetch=0,
            grid=(Bp // TB, Lp // TL),
            in_specs=[
                pl.BlockSpec((TB, TL, KC), lambda i, t: (i, t, 0)),
                pl.BlockSpec((KC, Cp), lambda i, t: (0, 0)),
                pl.BlockSpec((1, Cp), lambda i, t: (0, 0)),
                pl.BlockSpec((TL, Cp), lambda i, t: (t, 0)),
            ],
            out_specs=pl.BlockSpec((TB, Cp), lambda i, t: (i, 0)),
        ),
        compiler_params=pltpu.CompilerParams(
            dimension_semantics=("parallel", "arbitrary")),
        cost_estimate=pl.CostEstimate(
            flops=flops, transcendentals=0, bytes_accessed=bytes_accessed),
    )(x_col, w_packed, bias, mask)

    # dropout (eval mode) == identity; strip batch/channel padding.
    return out[:B, :Ctot]


def init_char_cnn_params(key, char_embedding_dim, filter_num, windows_size):
    params = []
    for k in windows_size:
        key, kw, kb = jax.random.split(key, 3)
        w = 0.1 * jax.random.normal(
            kw, (k, char_embedding_dim, filter_num), dtype=jnp.float32)
        b = 0.1 * jax.random.normal(kb, (1, filter_num), dtype=jnp.float32)
        params.append((k, w, b))
    return params


def _char_cnn_reference(x, params):
    """Pure-JAX f32 reference: conv1d -> ReLU -> global max over time -> concat."""
    B, L, _ = x.shape
    pooled = []
    for (k, w, b) in params:
        Lout = L - k + 1
        y = jnp.zeros((B, Lout, w.shape[-1]), jnp.float32) + b.reshape(1, 1, -1)
        for j in range(k):
            y = y + jnp.einsum('blc,cf->blf', x[:, j:j + Lout, :], w[j])
        pooled.append(jnp.max(jnp.maximum(y, 0.0), axis=1))
    return jnp.concatenate(pooled, axis=1)


if __name__ == "__main__":
    # Small, deterministic shapes consistent with the module.
    B = 2                    # batch
    L = 16                   # char sequence length
    char_embedding_dim = 32
    filter_num = 32
    windows_size = (2, 3, 4)

    key = jax.random.PRNGKey(0)
    key, kx = jax.random.split(key)
    x = jax.random.normal(kx, (B, L, char_embedding_dim), dtype=jnp.float32)
    params = init_char_cnn_params(key, char_embedding_dim, filter_num,
                                  windows_size)

    out = jax.block_until_ready(char_cnn_forward(x, params))
    assert out.shape == (B, filter_num * len(windows_size)), out.shape

    # Correctness check against a pure-JAX f32 reference (bf16 matmul tolerance).
    ref = jax.block_until_ready(_char_cnn_reference(x, params))
    np.testing.assert_allclose(np.asarray(out), np.asarray(ref),
                               rtol=2e-2, atol=2e-2)

    print("KERNEL_OK")
</pallas_src>

<mosaic_0001>
module attributes {stable_mosaic.version = 11 : i64} {
  func.func @_char_cnn_fused_kernel(%arg0: i32, %arg1: i32, %arg2: memref<2x16x128xbf16, #tpu.memory_space<vmem>>, %arg3: memref<128x128xbf16, #tpu.memory_space<vmem>>, %arg4: memref<1x128xf32, #tpu.memory_space<vmem>>, %arg5: memref<16x128xf32, #tpu.memory_space<vmem>>, %arg6: memref<2x128xf32, #tpu.memory_space<vmem>>) attributes {dimension_semantics = [#tpu.dimension_semantics<parallel>, #tpu.dimension_semantics<arbitrary>], iteration_bounds = array<i64: 1, 1>, scalar_prefetch = 0 : i64, scratch_operands = 0 : i64, tpu.core_type = #tpu.core_type<tc>, window_params = [{transform_indices = @transform_0, window_bounds = array<i64: 2, 16, 128>}, {pipeline_mode = #tpu.pipeline_mode<synchronous>, transform_indices = @transform_1, window_bounds = array<i64: 128, 128>}, {pipeline_mode = #tpu.pipeline_mode<synchronous>, transform_indices = @transform_2, window_bounds = array<i64: 1, 128>}, {transform_indices = @transform_3, window_bounds = array<i64: 16, 128>}, {transform_indices = @transform_4, window_bounds = array<i64: 2, 128>}]} {
    %c0_i32 = arith.constant 0 : i32
    %0 = arith.cmpi eq, %arg1, %c0_i32 : i32
    %1 = arith.extui %0 : i1 to i32
    %c0_i32_0 = arith.constant 0 : i32
    %2 = arith.cmpi ne, %1, %c0_i32_0 : i32
    scf.if %2 {
      %cst_15 = arith.constant 0.000000e+00 : f32
      %21 = vector.broadcast %cst_15 : f32 to vector<2x128xf32>
      %c0_16 = arith.constant 0 : index
      %c0_17 = arith.constant 0 : index
      %22 = vector.load %arg6[%c0_16, %c0_17] : memref<2x128xf32, #tpu.memory_space<vmem>>, vector<2x128xf32>
      tpu.vector_store %arg6[%c0_16, %c0_17], %21 {strides = array<i32>} : memref<2x128xf32, #tpu.memory_space<vmem>>, vector<2x128xf32>,
    } else {
    }
    %c0 = arith.constant 0 : index
    %c0_1 = arith.constant 0 : index
    %c0_2 = arith.constant 0 : index
    %3 = vector.load %arg2[%c0, %c0_1, %c0_2] : memref<2x16x128xbf16, #tpu.memory_space<vmem>>, vector<2x16x128xbf16>
    %4 = vector.shape_cast %3 : vector<2x16x128xbf16> to vector<32x128xbf16>
    %c0_3 = arith.constant 0 : index
    %c0_4 = arith.constant 0 : index
    %5 = vector.load %arg3[%c0_3, %c0_4] : memref<128x128xbf16, #tpu.memory_space<vmem>>, vector<128x128xbf16>
    %cst = arith.constant dense<0.000000e+00> : vector<32x128xf32>
    %6 = tpu.matmul %4, %5, %cst {dimension_numbers = #tpu.dot_dimension_numbers<[1], [0], [0], [1], [0, 0, 1, 1], [], []>} : vector<32x128xbf16>, vector<128x128xbf16>, vector<32x128xf32> -> vector<32x128xf32>
    %c0_5 = arith.constant 0 : index
    %c0_6 = arith.constant 0 : index
    %7 = vector.load %arg4[%c0_5, %c0_6] : memref<1x128xf32, #tpu.memory_space<vmem>>, vector<1x128xf32>
    %8 = vector.broadcast %7 : vector<1x128xf32> to vector<32x128xf32>
    %9 = arith.addf %6, %8 : vector<32x128xf32>
    %cst_7 = arith.constant 0.000000e+00 : f32
    %10 = vector.broadcast %cst_7 : f32 to vector<32x128xf32>
    %11 = arith.maximumf %9, %10 : vector<32x128xf32>
    %12 = vector.shape_cast %11 : vector<32x128xf32> to vector<2x16x128xf32>
    %c0_8 = arith.constant 0 : index
    %c0_9 = arith.constant 0 : index
    %13 = vector.load %arg5[%c0_8, %c0_9] : memref<16x128xf32, #tpu.memory_space<vmem>>, vector<16x128xf32>
    %14 = vector.shape_cast %13 : vector<16x128xf32> to vector<1x16x128xf32>
    %15 = vector.broadcast %14 : vector<1x16x128xf32> to vector<2x16x128xf32>
    %16 = arith.mulf %12, %15 : vector<2x16x128xf32>
    %c0_10 = arith.constant 0 : index
    %c0_11 = arith.constant 0 : index
    %17 = vector.load %arg6[%c0_10, %c0_11] : memref<2x128xf32, #tpu.memory_space<vmem>>, vector<2x128xf32>
    %cst_12 = arith.constant dense<0xFF800000> : vector<2x128xf32>
    %18 = vector.multi_reduction <maximumf>, %16, %cst_12 [1] : vector<2x16x128xf32> to vector<2x128xf32>
    %19 = arith.maximumf %17, %18 : vector<2x128xf32>
    %c0_13 = arith.constant 0 : index
    %c0_14 = arith.constant 0 : index
    %20 = vector.load %arg6[%c0_13, %c0_14] : memref<2x128xf32, #tpu.memory_space<vmem>>, vector<2x128xf32>
    tpu.vector_store %arg6[%c0_13, %c0_14], %19 {strides = array<i32>} : memref<2x128xf32, #tpu.memory_space<vmem>>, vector<2x128xf32>,
    return
  }
  func.func @transform_0(%arg0: i32, %arg1: i32) -> (i32, i32, i32) {
    %c0_i32 = arith.constant 0 : i32
    %c0_i32_0 = arith.constant 0 : i32
    return %arg0, %arg1, %c0_i32 : i32, i32, i32
  }
  func.func @transform_1(%arg0: i32, %arg1: i32) -> (i32, i32) {
    %c0_i32 = arith.constant 0 : i32
    %c0_i32_0 = arith.constant 0 : i32
    %c0_i32_1 = arith.constant 0 : i32
    return %c0_i32, %c0_i32_0 : i32, i32
  }
  func.func @transform_2(%arg0: i32, %arg1: i32) -> (i32, i32) {
    %c0_i32 = arith.constant 0 : i32
    %c0_i32_0 = arith.constant 0 : i32
    %c0_i32_1 = arith.constant 0 : i32
    return %c0_i32, %c0_i32_0 : i32, i32
  }
  func.func @transform_3(%arg0: i32, %arg1: i32) -> (i32, i32) {
    %c0_i32 = arith.constant 0 : i32
    %c0_i32_0 = arith.constant 0 : i32
    return %arg1, %c0_i32 : i32, i32
  }
  func.func @transform_4(%arg0: i32, %arg1: i32) -> (i32, i32) {
    %c0_i32 = arith.constant 0 : i32
    %c0_i32_0 = arith.constant 0 : i32
    return %arg0, %c0_i32 : i32, i32
  }
}

</mosaic_0001>

<llo_original>
// kernel: tpu_custom_call.1
$region0: #{tpu_custom_call.1}
  #allocation0 [shape = 'u32[]', space=smem, size = 0x4, offset = 0x4, fixed_abs, tag = 'smem constant byte address 0x4 - core index']
  #allocation1 [shape = 'u32[144,128]{1,0:T(1,128)}', space=vmem, size = 0x12000, scoped, tag = 'internal scratch']
  %s0 = inlined_call_operand.hbm [shape: bf16[2,16,128], index: 0, kind: input, shape index: {}]
  %s1 = inlined_call_operand.hbm [shape: bf16[128,128], index: 1, kind: input, shape index: {}]
  %s2 = inlined_call_operand.vmem [shape: f32[1,128], index: 2, kind: input, shape index: {}]
  %s3 = inlined_call_operand.hbm [shape: f32[16,128], index: 3, kind: input, shape index: {}]
  %s4 = inlined_call_operand.hbm [shape: f32[2,128], index: 4, kind: output, shape index: {}]
  %s5 = sld [smem:[#allocation0]]
  $region42: #{tpu_custom_call.1} parent=0
    _
  %s7 = ssub.s32 1, %s5
  %s8 = scalar_select 0, %s7, %s5
  $region1: #{tpu_custom_call.1} parent=0
    #allocation2 [shape = 'u8[8192]{0}', space=vmem, size = 0x2000, scoped, tag = 'input window, operand 0, single buffered']
    #allocation3 [shape = 's32[1]{0}', space=sflag, size = 0x4, scoped, tag = 'scoped memory for tpu_custom_call.1']
    #allocation4 [shape = 's32[1]{0}', space=sflag, size = 0x4, scoped, tag = 'scoped memory for tpu_custom_call.1']
    #allocation5 [shape = 'u8[32768]{0}', space=vmem, size = 0x8000, scoped, tag = 'input window, operand 1, single buffered']
    #allocation6 [shape = 's32[1]{0}', space=sflag, size = 0x4, scoped, tag = 'scoped memory for tpu_custom_call.1']
    #allocation7 [shape = 'u8[8192]{0}', space=vmem, size = 0x2000, scoped, tag = 'input window, operand 3, single buffered']
    #allocation8 [shape = 'u8[1024]{0}', space=vmem, size = 0x400, scoped, tag = 'output window, operand 0, single buffered']
    %9 = vsyncpa [#allocation3], 0
    %10 = vsyncpa [#allocation6], 0
    %11 = vsyncpa [#allocation4], 0
    // Predicated region
    $region2: #{tpu_custom_call.1} parent=1 // pred_check
      _
    $region3: #{tpu_custom_call.1} parent=1 // pred_check_branch
      %13 = sbr.rel (0) target = $region5
    $region4: #{tpu_custom_call.1} parent=1 // pred_region
      %s15 = ssub.s32 256, 256
      %16 = vsyncadd [#allocation3], %s15
      %s17 = sshll.u32 [#allocation2], 4
      %s18 = int_to_ptr.vmem [resolvable:$true] %s17
      %23 = dma.hbm_to_vmem [thread:$0]  %s0, 256, %s18, [#allocation3], 64, 64, 4
    $region5: #{tpu_custom_call.1} parent=1 // pred_fallthru
      _
    // Predicated region
    $region6: #{tpu_custom_call.1} parent=1 // pred_check
      _
    $region7: #{tpu_custom_call.1} parent=1 // pred_check_branch
      %25 = sbr.rel (0) target = $region9
    $region8: #{tpu_custom_call.1} parent=1 // pred_region
      %s27 = ssub.s32 1024, 1024
      %28 = vsyncadd [#allocation6], %s27
      %s29 = sshll.u32 [#allocation5], 4
      %s30 = int_to_ptr.vmem [resolvable:$true] %s29
      %35 = dma.hbm_to_vmem [thread:$0]  %s1, 1024, %s30, [#allocation6], 64, 64, 4
    $region9: #{tpu_custom_call.1} parent=1 // pred_fallthru
      _
    // Predicated region
    $region10: #{tpu_custom_call.1} parent=1 // pred_check
      _
    $region11: #{tpu_custom_call.1} parent=1 // pred_check_branch
      %37 = sbr.rel (0) target = $region13
    $region12: #{tpu_custom_call.1} parent=1 // pred_region
      _
    $region13: #{tpu_custom_call.1} parent=1 // pred_fallthru
      _
    // Predicated region
    $region14: #{tpu_custom_call.1} parent=1 // pred_check
      _
    $region15: #{tpu_custom_call.1} parent=1 // pred_check_branch
      %39 = sbr.rel (0) target = $region17
    $region16: #{tpu_custom_call.1} parent=1 // pred_region
      %s41 = ssub.s32 256, 256
      %42 = vsyncadd [#allocation6], %s41
      %s43 = sshll.u32 [#allocation7], 4
      %s44 = int_to_ptr.vmem [resolvable:$true] %s43
      %49 = dma.hbm_to_vmem [thread:$0]  %s3, 256, %s44, [#allocation6], 128, 128, 8
    $region17: #{tpu_custom_call.1} parent=1 // pred_fallthru
      _
    // Predicated region
    $region18: #{tpu_custom_call.1} parent=1 // pred_check
      _
    $region19: #{tpu_custom_call.1} parent=1 // pred_check_branch
      %51 = sbr.rel (0) target = $region21
    $region20: #{tpu_custom_call.1} parent=1 // pred_region
      %52 = dma.done [#allocation3], 256
    $region21: #{tpu_custom_call.1} parent=1 // pred_fallthru
      _
    // Predicated region
    $region22: #{tpu_custom_call.1} parent=1 // pred_check
      _
    $region23: #{tpu_custom_call.1} parent=1 // pred_check_branch
      %54 = sbr.rel (0) target = $region25
    $region24: #{tpu_custom_call.1} parent=1 // pred_region
      %55 = dma.done [#allocation6], 1024
    $region25: #{tpu_custom_call.1} parent=1 // pred_fallthru
      _
    // Predicated region
    $region26: #{tpu_custom_call.1} parent=1 // pred_check
      _
    $region27: #{tpu_custom_call.1} parent=1 // pred_check_branch
      %57 = sbr.rel (0) target = $region29
    $region28: #{tpu_custom_call.1} parent=1 // pred_region
      %58 = dma.done [#allocation6], 256
    $region29: #{tpu_custom_call.1} parent=1 // pred_fallthru
      _
    %p60 = scmp.eq.s32.totalorder 0, 0
    // Predicated region
    $region30: #{tpu_custom_call.1} parent=1 // pred_check
      %p61 = pneg %p60
    $region31: #{tpu_custom_call.1} parent=1 // pred_check_branch
      %63 = sbr.rel (%p61) target = $region33
    $region32: #{tpu_custom_call.1} parent=1 // pred_region
      %64 = vst [vmem:[#allocation8] sm:$0x3] 0.0
    $region33: #{tpu_custom_call.1} parent=1 // pred_fallthru
      _
    %v65 = vld [vmem:[#allocation2] sm:$0xf]
    %v66 = vld [vmem:[#allocation2 + $0x4] sm:$0xf]
    %v67 = vld [vmem:[#allocation2 + $0x8] sm:$0xf]
    %v68 = vld [vmem:[#allocation2 + $0xc] sm:$0xf]
    %v69 = vld [vmem:[#allocation5] sm:$0xf]
    %v70 = vld [vmem:[#allocation5 + $0x4] sm:$0xf]
    %v71 = vld [vmem:[#allocation5 + $0x8] sm:$0xf]
    %v72 = vld [vmem:[#allocation5 + $0xc] sm:$0xf]
    %v73 = vld [vmem:[#allocation5 + $0x10] sm:$0xf]
    %v74 = vld [vmem:[#allocation5 + $0x14] sm:$0xf]
    %v75 = vld [vmem:[#allocation5 + $0x18] sm:$0xf]
    %v76 = vld [vmem:[#allocation5 + $0x1c] sm:$0xf]
    %v77 = vld [vmem:[#allocation5 + $0x20] sm:$0xf]
    %v78 = vld [vmem:[#allocation5 + $0x24] sm:$0xf]
    %v79 = vld [vmem:[#allocation5 + $0x28] sm:$0xf]
    %v80 = vld [vmem:[#allocation5 + $0x2c] sm:$0xf]
    %v81 = vld [vmem:[#allocation5 + $0x30] sm:$0xf]
    %v82 = vld [vmem:[#allocation5 + $0x34] sm:$0xf]
    %v83 = vld [vmem:[#allocation5 + $0x38] sm:$0xf]
    %v84 = vld [vmem:[#allocation5 + $0x3c] sm:$0xf]
    %v85 = vld [vmem:[%s2] sm:$0x1]
    %v87 = vlaneseq
    %v88 = vshrl.u32 %v87, 7
    %v89 = vsub.s32 0, %v88
    %v90 = vrot.slane %v85, %v89
    %v96 = vunpack.c.l.b16 %v65
    %v97 = vunpack.c.l.b16 %v66
    %v98 = vunpack.c.l.b16 %v67
    %v99 = vunpack.c.l.b16 %v68
    %v100 = vpack.c.b16 %v97, %v96
    %v101 = vpack.c.b16 %v99, %v98
    %v120 = vunpack.c.l.b16 %v69
    %v121 = vunpack.c.l.b16 %v70
    %v122 = vunpack.c.l.b16 %v71
    %v123 = vunpack.c.l.b16 %v72
    %v124 = vunpack.c.l.b16 %v73
    %v125 = vunpack.c.l.b16 %v74
    %v126 = vunpack.c.l.b16 %v75
    %v127 = vunpack.c.l.b16 %v76
    %v128 = vunpack.c.l.b16 %v77
    %v129 = vunpack.c.l.b16 %v78
    %v130 = vunpack.c.l.b16 %v79
    %v131 = vunpack.c.l.b16 %v80
    %v132 = vunpack.c.l.b16 %v81
    %v133 = vunpack.c.l.b16 %v82
    %v134 = vunpack.c.l.b16 %v83
    %v135 = vunpack.c.l.b16 %v84
    %v136 = vpack.c.b16 %v121, %v120
    %v137 = vpack.c.b16 %v123, %v122
    %v138 = vpack.c.b16 %v125, %v124
    %v139 = vpack.c.b16 %v127, %v126
    %v140 = vpack.c.b16 %v129, %v128
    %v141 = vpack.c.b16 %v131, %v130
    %v142 = vpack.c.b16 %v133, %v132
    %v143 = vpack.c.b16 %v135, %v134
    %152 = vmatprep.subr.bf16.mxu0 0
    %153 = vmatpush1.bf16.msra.mxu0 %v143
    %154 = vmatprep.subr.bf16.mxu0 0
    %155 = vmatpush1.bf16.msra.mxu0 %v142
    %156 = vmatprep.subr.bf16.mxu0 0
    %157 = vmatpush1.bf16.msra.mxu0 %v141
    %158 = vmatprep.subr.bf16.mxu0 0
    %159 = vmatpush1.bf16.msra.mxu0 %v140
    %160 = vmatprep.subr.bf16.mxu0 0
    %161 = vmatpush1.bf16.msra.mxu0 %v139
    %162 = vmatprep.subr.bf16.mxu0 0
    %163 = vmatpush1.bf16.msra.mxu0 %v138
    %164 = vmatprep.subr.bf16.mxu0 0
    %165 = vmatpush1.bf16.msra.mxu0 %v137
    %166 = vmatprep.subr.bf16.mxu0 0
    %167 = vmatpush1.bf16.msra.mxu0 %v136
    %168 = vmatprep.subr.bf16.mxu0 0
    %169 = vmatpush2.bf16.msra.mxu0 0
    %170 = vmatprep.subr.bf16.mxu0 0
    %171 = vmatpush2.bf16.msra.mxu0 0
    %172 = vmatprep.subr.bf16.mxu0 0
    %173 = vmatpush2.bf16.msra.mxu0 0
    %174 = vmatprep.subr.bf16.mxu0 0
    %175 = vmatpush2.bf16.msra.mxu0 0
    %176 = vmatprep.subr.bf16.mxu0 0
    %177 = vmatpush2.bf16.msra.mxu0 0
    %178 = vmatprep.subr.bf16.mxu0 0
    %179 = vmatpush2.bf16.msra.mxu0 0
    %180 = vmatprep.subr.bf16.mxu0 0
    %181 = vmatpush2.bf16.msra.mxu0 0
    %182 = vmatprep.subr.bf16.mxu0 0
    %183 = vmatpush2.bf16.msra.mxu0 0
    %184 = vmatprep.mubr.bf16.mxu0 0
    %185 = vmatmul.mubr.bf16.gmra.mxu0 %v100
    %v186 = vpop.f32.mrf.mxu0
    %v187 = vadd.f32 %v90, %v186
    %v188 = vpop.f32.mrf.mxu0
    %v189 = vpop.f32.mrf.mxu0
    %v190 = vadd.f32 %v90, %v189
    %v191 = vpop.f32.mrf.mxu0
    %192 = vmatprep.mubr.bf16.mxu0 0
    %193 = vmatmul.mubr.bf16.gmra.mxu0 %v101
    %v194 = vpop.f32.mrf.mxu0
    %v195 = vadd.f32 %v90, %v194
    %v196 = vpop.f32.mrf.mxu0
    %v197 = vpop.f32.mrf.mxu0
    %v198 = vadd.f32 %v90, %v197
    %v199 = vpop.f32.mrf.mxu0
    %200 = vdwg.mxu0
    %v201 = vmax.f32 %v187, 0.0
    %v202 = vmax.f32 %v190, 0.0
    %v203 = vmax.f32 %v195, 0.0
    %v204 = vmax.f32 %v198, 0.0
    %v205 = vld [vmem:[#allocation7] sm:$0xff]
    %v206 = vld [vmem:[#allocation7 + $0x8] sm:$0xff]
    %v207 = vmul.f32 %v201, %v205
    %v208 = vmul.f32 %v202, %v206
    %v209 = vmul.f32 %v203, %v205
    %v210 = vmul.f32 %v204, %v206
    %v211 = vld [vmem:[#allocation8] sm:$0x3]
    %v212 = vmax.f32 %v207, %v208
    %v213 = vrot.slane %v212, 4
    %v214 = vmax.f32 %v212, %v213
    %v215 = vrot.slane %v214, 2
    %v216 = vmax.f32 %v214, %v215
    %v217 = vrot.slane %v216, 1
    %v218 = vmax.f32 %v216, %v217
    %v219 = vmax.f32 %v209, %v210
    %v220 = vrot.slane %v219, 4
    %v221 = vmax.f32 %v219, %v220
    %v222 = vrot.slane %v221, 2
    %v223 = vmax.f32 %v221, %v222
    %v224 = vrot.slane %v223, 1
    %v225 = vmax.f32 %v223, %v224
    %vm228 = vcmask 1041409
    %v229 = vsel %vm228, %v225, %v218
    %v231 = vmax.f32 %v211, %v229
    %232 = vst [vmem:[#allocation8] sm:$0x3] %v231
    // Predicated region
    $region34: #{tpu_custom_call.1} parent=1 // pred_check
      _
    $region35: #{tpu_custom_call.1} parent=1 // pred_check_branch
      %234 = sbr.rel (0) target = $region37
    $region36: #{tpu_custom_call.1} parent=1 // pred_region
      %s236 = ssub.s32 32, 32
      %237 = vsyncadd [#allocation4], %s236
      %s239 = sshll.u32 [#allocation8], 4
      %s240 = int_to_ptr.vmem [resolvable:$true] %s239
      %242 = dma.vmem_to_hbm [thread:$0]  %s240, 32, %s4, [#allocation4]
    $region37: #{tpu_custom_call.1} parent=1 // pred_fallthru
      _
    // Predicated region
    $region38: #{tpu_custom_call.1} parent=1 // pred_check
      _
    $region39: #{tpu_custom_call.1} parent=1 // pred_check_branch
      %244 = sbr.rel (0) target = $region41
    $region40: #{tpu_custom_call.1} parent=1 // pred_region
      %245 = dma.done [#allocation4], 32
    $region41: #{tpu_custom_call.1} parent=1 // pred_fallthru
      _
    %246 = vsyncpa [#allocation3], 1
    %247 = vsyncpa [#allocation6], 1
    %248 = vsyncpa [#allocation4], 1

</llo_original>
